<compile_context>
chip_gen: v7x
topology: tpu7x:2x2x1
jax: 0.10.0
libtpu: 0.0.40
codegen_flags: <defaults>
</compile_context>

<pallas_src>
import math

import jax
import jax.numpy as jnp
import numpy as np
from jax.experimental import pallas as pl
from jax.experimental.pallas import tpu as pltpu


# ----------------------------------------------------------------------------
# hardware / VMEM budgeting (generation-aware: v5e/v6e 128 MiB, v7x 64 MiB)
# ----------------------------------------------------------------------------
def _vmem_capacity_bytes():
    try:
        cap = int(getattr(pltpu.get_tpu_info(), "vmem_capacity_bytes"))
        if cap > 0:
            return cap
    except Exception:
        pass
    return 64 << 20        # conservative (v7x-sized) if the query is unavailable


def _vmem_budget_bytes():
    # ~15% headroom for compiler scratch / extra output buffers
    return int(0.85 * _vmem_capacity_bytes())


def _vmem_limit(need_bytes):
    return int(min(max(need_bytes + (8 << 20), 16 << 20), _vmem_budget_bytes()))


def _pick_spatial_tile(S, C, itemsize):
    """Whole plane when small, otherwise the largest divisor of S with
    t >= 16 (matmul M = t*t >= 256 for the 256x256 MXUs on v6e/v7x) that keeps
    the output tile modest."""
    if S <= 32:
        return S
    for t in (64, 48, 32, 24, 16):
        if S % t == 0 and 2 * t * t * C * itemsize <= (4 << 20):
            return t
    for t in (16, 8):
        if S % t == 0:
            return t
    return S


# ----------------------------------------------------------------------------
# fused path: rot90 + chunk + Linear + residual in one grid step
# ----------------------------------------------------------------------------
def _spin_fused_kernel(x_ref, w1_ref, w2_ref, w3_ref, b_ref, o_ref):
    # x_ref : (S, S, C)  whole plane of this batch element (re-fetched from
    #                    HBM only when the batch grid index changes).
    # wg_ref: (C/3, C)   row slices of W^T, VMEM resident.
    # b_ref : (1, C)     bias.
    # o_ref : (t, t, C)  output tile at spatial block (i, j).
    i = pl.program_id(1)
    j = pl.program_id(2)
    n = pl.num_programs(1)
    t, _, C = o_ref.shape
    c3 = C // 3

    def chunk(bi, bj, g):
        r0 = pl.multiple_of(bi * t, t)
        c0 = pl.multiple_of(bj * t, t)
        return x_ref[pl.ds(r0, t), pl.ds(c0, t), g * c3:(g + 1) * c3]

    # torch.rot90(chunk_g, k=g, dims=[1,2]) == rotated source-block coords
    # (below) followed by an in-tile rot90 by the same k.  k=2 is pure flips
    # (no transpose); only k=1/k=3 need the XLU transpose, applied to the
    # narrow (t, t, c3) chunks *before* the matmul.
    p1 = jnp.rot90(chunk(j, n - 1 - i, 0), k=1, axes=(0, 1))
    p2 = chunk(n - 1 - i, n - 1 - j, 1)[::-1, ::-1, :]
    p3 = jnp.rot90(chunk(n - 1 - j, i, 2), k=3, axes=(0, 1))

    res = x_ref[pl.ds(pl.multiple_of(i * t, t), t),
                pl.ds(pl.multiple_of(j * t, t), t), :]

    # Three accumulated MXU dots against W^T row slices: the channel concat
    # is never materialized (no lane-axis concatenate / relayout).
    acc = jnp.dot(p1.reshape(t * t, c3), w1_ref[...],
                  preferred_element_type=jnp.float32)
    acc += jnp.dot(p2.reshape(t * t, c3), w2_ref[...],
                   preferred_element_type=jnp.float32)
    acc += jnp.dot(p3.reshape(t * t, c3), w3_ref[...],
                   preferred_element_type=jnp.float32)

    out = acc.reshape(t, t, C) + b_ref[...] + res
    o_ref[...] = out.astype(o_ref.dtype)


def _fused_vmem_plan(S, C, t, itemsize):
    budget = _vmem_budget_bytes()
    plane = S * S * C * itemsize
    wbytes = C * C * itemsize + C * itemsize          # 3 x (C/3, C) + bias
    out_tile = t * t * C * itemsize
    plane_bufs = 2 if 2 * plane <= budget // 2 else 1     # single-buffer on v7x
    w_bufs = 2 if 2 * wbytes <= (8 << 20) else 1
    scratch = 6 * t * t * C * 4 + (2 << 20)               # in-kernel temporaries
    need = plane_bufs * plane + w_bufs * wbytes + 2 * out_tile + scratch
    return plane_bufs, w_bufs, need, budget


def _fused_fits(S, C, t, itemsize):
    _, _, need, budget = _fused_vmem_plan(S, C, t, itemsize)
    return need <= budget


def _fused_call(x, w1, w2, w3, b2, t):
    B, S, _, C = x.shape
    n = S // t
    plane_bufs, w_bufs, need, _ = _fused_vmem_plan(S, C, t, x.dtype.itemsize)

    def spec(shape, imap, bufs):
        if bufs == 1:
            return pl.BlockSpec(shape, imap, pipeline_mode=pl.Buffered(1))
        return pl.BlockSpec(shape, imap)

    # Megacore: shard on batch when B > 1 so both cores never re-DMA the same
    # resident plane; only shard the spatial axes when there is no batch.
    dims = (("parallel", "arbitrary", "arbitrary") if B > 1
            else ("arbitrary", "parallel", "parallel"))

    return pl.pallas_call(
        _spin_fused_kernel,
        out_shape=jax.ShapeDtypeStruct((B, S, S, C), x.dtype),
        grid_spec=pltpu.PrefetchScalarGridSpec(
            num_scalar_prefetch=0,
            grid=(B, n, n),
            in_specs=[
                spec((None, S, S, C), lambda b, i, j: (b, 0, 0, 0), plane_bufs),
                spec((C // 3, C), lambda b, i, j: (0, 0), w_bufs),
                spec((C // 3, C), lambda b, i, j: (0, 0), w_bufs),
                spec((C // 3, C), lambda b, i, j: (0, 0), w_bufs),
                spec((1, C), lambda b, i, j: (0, 0), w_bufs),
            ],
            out_specs=pl.BlockSpec((None, t, t, C), lambda b, i, j: (b, i, j, 0)),
        ),
        compiler_params=pltpu.CompilerParams(
            dimension_semantics=dims,
            vmem_limit_bytes=_vmem_limit(need),
        ),
    )(x, w1, w2, w3, b2)


# ----------------------------------------------------------------------------
# robust path: XLA chunk rotations + one Pallas 3-dot / bias / residual kernel
# ----------------------------------------------------------------------------
def _proj3_kernel(p1_ref, p2_ref, p3_ref, x_ref, w1_ref, w2_ref, w3_ref,
                  b_ref, o_ref):
    acc = jnp.dot(p1_ref[...], w1_ref[...], preferred_element_type=jnp.float32)
    acc += jnp.dot(p2_ref[...], w2_ref[...], preferred_element_type=jnp.float32)
    acc += jnp.dot(p3_ref[...], w3_ref[...], preferred_element_type=jnp.float32)
    o_ref[...] = (acc + b_ref[...] + x_ref[...]).astype(o_ref.dtype)


def _spin_unfused(x, w_t, b):
    B, S, _, C = x.shape
    c3 = C // 3
    itemsize = x.dtype.itemsize
    N = B * S * S

    # rot90 of each channel chunk as XLA permutation copies; the concatenated
    # p_all is never written to HBM.
    r1 = jnp.rot90(x[..., 0 * c3:1 * c3], k=1, axes=(1, 2))
    r2 = jnp.rot90(x[..., 1 * c3:2 * c3], k=2, axes=(1, 2))
    r3 = jnp.rot90(x[..., 2 * c3:3 * c3], k=3, axes=(1, 2))

    # Lane-dense packing: group L consecutive rows into the lane axis so every
    # kernel operand's last dim is a multiple of 128 (no masked vst).  The row
    # grouping is a free (contiguous) reshape on the wrapper side; the price
    # is an L-times larger block-diagonal weight, only paid while it stays
    # small and the kernel remains memory bound.
    L = 128 // math.gcd(C, 128) if C % 128 else 1
    if L > 1 and (L * C > 512 or N % L != 0):
        L = 1
    Nd, Kd, Cd = N // L, L * c3, L * C

    w1 = w_t[0 * c3:1 * c3, :]
    w2 = w_t[1 * c3:2 * c3, :]
    w3 = w_t[2 * c3:3 * c3, :]
    if L > 1:
        eye = jnp.eye(L, dtype=w_t.dtype)
        w1 = jnp.kron(eye, w1)
        w2 = jnp.kron(eye, w2)
        w3 = jnp.kron(eye, w3)
    bd = jnp.tile(b.reshape(1, C), (1, L))

    # TODO(synk): tile the weights over K/N for extremely large hidden_dim.
    budget = _vmem_budget_bytes()
    wd_bytes = 3 * Kd * Cd * itemsize + Cd * itemsize
    tn = Nd
    for cand in (2048, 1024, 512, 256, 128, 64, 32, 16, 8):
        if Nd % cand == 0 and 6 * cand * Cd * itemsize + 2 * wd_bytes <= budget:
            tn = cand
            break
    need = 6 * tn * Cd * itemsize + 2 * wd_bytes

    out_flat = pl.pallas_call(
        _proj3_kernel,
        out_shape=jax.ShapeDtypeStruct((Nd, Cd), x.dtype),
        grid_spec=pltpu.PrefetchScalarGridSpec(
            num_scalar_prefetch=0,
            grid=(Nd // tn,),
            in_specs=[
                pl.BlockSpec((tn, Kd), lambda i: (i, 0)),
                pl.BlockSpec((tn, Kd), lambda i: (i, 0)),
                pl.BlockSpec((tn, Kd), lambda i: (i, 0)),
                pl.BlockSpec((tn, Cd), lambda i: (i, 0)),
                pl.BlockSpec((Kd, Cd), lambda i: (0, 0)),
                pl.BlockSpec((Kd, Cd), lambda i: (0, 0)),
                pl.BlockSpec((Kd, Cd), lambda i: (0, 0)),
                pl.BlockSpec((1, Cd), lambda i: (0, 0)),
            ],
            out_specs=pl.BlockSpec((tn, Cd), lambda i: (i, 0)),
        ),
        compiler_params=pltpu.CompilerParams(
            dimension_semantics=("parallel",),
            vmem_limit_bytes=_vmem_limit(need),
        ),
    )(
        r1.reshape(Nd, Kd), r2.reshape(Nd, Kd), r3.reshape(Nd, Kd),
        x.reshape(Nd, Cd), w1, w2, w3, bd,
    )
    return out_flat.reshape(B, S, S, C)


# ----------------------------------------------------------------------------
# reference + one-time path probe
# ----------------------------------------------------------------------------
def _reference(x, w, b):
    c3 = x.shape[-1] // 3
    p1 = jnp.rot90(x[..., :c3], k=1, axes=(1, 2))
    p2 = jnp.rot90(x[..., c3:2 * c3], k=2, axes=(1, 2))
    p3 = jnp.rot90(x[..., 2 * c3:], k=3, axes=(1, 2))
    p_all = jnp.concatenate([p1, p2, p3], axis=-1)
    return jnp.einsum("bhwc,oc->bhwo", p_all, w) + b + x


_FUSED_STATUS = {}   # (S, C, dtype, tile) -> bool


def _fused_supported(S, C, dtype, t):
    """One-time cached probe: compile the fused kernel (B=1) on this
    generation and check its numbers against the pure-JAX reference on tiny
    concrete data.  Runs once per (S, C, dtype, tile), never per call."""
    key = (int(S), int(C), jnp.dtype(dtype).name, int(t))
    if key in _FUSED_STATUS:
        return _FUSED_STATUS[key]
    ok = False
    try:
        c3 = C // 3
        rng = np.random.default_rng(0)
        xp = jnp.asarray(rng.standard_normal((1, S, S, C)), dtype=dtype)
        wp = jnp.asarray(0.1 * rng.standard_normal((C, C)), dtype=dtype)
        bp = jnp.asarray(0.1 * rng.standard_normal((C,)), dtype=dtype)
        w_t = wp.T
        got = _fused_call(xp, w_t[0:c3], w_t[c3:2 * c3], w_t[2 * c3:],
                          bp.reshape(1, C), t)
        want = _reference(xp, wp, bp)
        tol = 1e-2 if jnp.dtype(dtype).itemsize < 4 else 1e-4
        ok = bool(jnp.allclose(got, want, atol=tol, rtol=tol))
    except Exception:
        ok = False
    _FUSED_STATUS[key] = ok
    return ok


# ----------------------------------------------------------------------------
# public entry point
# ----------------------------------------------------------------------------
def spin_module_s3(x, w, b, *, spatial_tile=None, use_fused=None):
    """Forward pass of SpinModule_s3.

    x : (B, S, S, C) with square spatial dims and C % 3 == 0.
    w : (C, C) Linear weight (PyTorch out_features x in_features layout).
    b : (C,)  Linear bias.
    use_fused: None = auto (one-time cached lowering + accuracy probe),
               True = force the fused path, False = force the robust path.
    """
    B, H, W_, C = x.shape
    if H != W_:
        raise ValueError("SpinModule_s3 needs square spatial dims (rot90 + cat)")
    if C % 3 != 0:
        raise ValueError("hidden_dim must be divisible by 3")
    S, c3 = H, C // 3

    w_t = jnp.asarray(w).T                 # (C_in, C_out): kernels do p @ W^T
    b = jnp.asarray(b).reshape(C)

    t = spatial_tile if spatial_tile is not None else \
        _pick_spatial_tile(S, C, x.dtype.itemsize)
    if not (t == S or (S % t == 0 and t % 8 == 0)):
        raise ValueError("spatial_tile must divide S and be a multiple of 8 "
                         "(or equal S)")

    if use_fused is None:
        use_fused = (_fused_fits(S, C, t, x.dtype.itemsize)
                     and _fused_supported(S, C, x.dtype, t))

    if use_fused:
        return _fused_call(x, w_t[0:c3], w_t[c3:2 * c3], w_t[2 * c3:],
                           b.reshape(1, C), t)
    return _spin_unfused(x, w_t, b)


# ----------------------------------------------------------------------------
# self test
# ----------------------------------------------------------------------------
if __name__ == "__main__":
    # Shapes implied by the module: square spatial dims, hidden_dim % 3 == 0.
    B, S, C = 2, 16, 24

    key = jax.random.PRNGKey(0)
    kx, kw, kb = jax.random.split(key, 3)
    x = jax.random.normal(kx, (B, S, S, C), dtype=jnp.float32)

    bound = 1.0 / math.sqrt(C)             # nn.Linear-style init bounds
    w = jax.random.uniform(kw, (C, C), minval=-bound, maxval=bound,
                           dtype=jnp.float32)
    b = jax.random.uniform(kb, (C,), minval=-bound, maxval=bound,
                           dtype=jnp.float32)

    ref = jax.block_until_ready(_reference(x, w, b))

    # auto path (fused when it lowers on this generation, robust otherwise)
    out_auto = jax.block_until_ready(spin_module_s3(x, w, b))
    # multi-block tiling exercises the rotated block-coordinate algebra
    out_tiled = jax.block_until_ready(spin_module_s3(x, w, b, spatial_tile=8))
    # the robust (lane-dense, 3-dot) path is always kept verified
    out_robust = jax.block_until_ready(spin_module_s3(x, w, b, use_fused=False))

    for o in (out_auto, out_tiled, out_robust):
        assert o.shape == (B, S, S, C)
        assert jnp.allclose(o, ref, atol=1e-4, rtol=1e-4), "mismatch vs reference"

    print("KERNEL_OK")
</pallas_src>

<mosaic_0001>
module attributes {stable_mosaic.version = 11 : i64} {
  func.func @_proj3_kernel(%arg0: i32, %arg1: memref<32x128xf32, #tpu.memory_space<vmem>>, %arg2: memref<32x128xf32, #tpu.memory_space<vmem>>, %arg3: memref<32x128xf32, #tpu.memory_space<vmem>>, %arg4: memref<32x384xf32, #tpu.memory_space<vmem>>, %arg5: memref<128x384xf32, #tpu.memory_space<vmem>>, %arg6: memref<128x384xf32, #tpu.memory_space<vmem>>, %arg7: memref<128x384xf32, #tpu.memory_space<vmem>>, %arg8: memref<1x384xf32, #tpu.memory_space<vmem>>, %arg9: memref<32x384xf32, #tpu.memory_space<vmem>>) attributes {dimension_semantics = [#tpu.dimension_semantics<parallel>], iteration_bounds = array<i64: 1>, scalar_prefetch = 0 : i64, scratch_operands = 0 : i64, tpu.core_type = #tpu.core_type<tc>, window_params = [{transform_indices = @transform_0, window_bounds = array<i64: 32, 128>}, {transform_indices = @transform_1, window_bounds = array<i64: 32, 128>}, {transform_indices = @transform_2, window_bounds = array<i64: 32, 128>}, {transform_indices = @transform_3, window_bounds = array<i64: 32, 384>}, {pipeline_mode = #tpu.pipeline_mode<synchronous>, transform_indices = @transform_4, window_bounds = array<i64: 128, 384>}, {pipeline_mode = #tpu.pipeline_mode<synchronous>, transform_indices = @transform_5, window_bounds = array<i64: 128, 384>}, {pipeline_mode = #tpu.pipeline_mode<synchronous>, transform_indices = @transform_6, window_bounds = array<i64: 128, 384>}, {pipeline_mode = #tpu.pipeline_mode<synchronous>, transform_indices = @transform_7, window_bounds = array<i64: 1, 384>}, {transform_indices = @transform_8, window_bounds = array<i64: 32, 384>}]} {
    %c0 = arith.constant 0 : index
    %c0_0 = arith.constant 0 : index
    %0 = vector.load %arg1[%c0, %c0_0] : memref<32x128xf32, #tpu.memory_space<vmem>>, vector<32x128xf32>
    %c0_1 = arith.constant 0 : index
    %c0_2 = arith.constant 0 : index
    %1 = vector.load %arg5[%c0_1, %c0_2] : memref<128x384xf32, #tpu.memory_space<vmem>>, vector<128x384xf32>
    %cst = arith.constant dense<0.000000e+00> : vector<32x384xf32>
    %2 = tpu.matmul %0, %1, %cst {dimension_numbers = #tpu.dot_dimension_numbers<[1], [0], [0], [1], [0, 0, 1, 1], [], []>} : vector<32x128xf32>, vector<128x384xf32>, vector<32x384xf32> -> vector<32x384xf32>
    %c0_3 = arith.constant 0 : index
    %c0_4 = arith.constant 0 : index
    %3 = vector.load %arg2[%c0_3, %c0_4] : memref<32x128xf32, #tpu.memory_space<vmem>>, vector<32x128xf32>
    %c0_5 = arith.constant 0 : index
    %c0_6 = arith.constant 0 : index
    %4 = vector.load %arg6[%c0_5, %c0_6] : memref<128x384xf32, #tpu.memory_space<vmem>>, vector<128x384xf32>
    %cst_7 = arith.constant dense<0.000000e+00> : vector<32x384xf32>
    %5 = tpu.matmul %3, %4, %cst_7 {dimension_numbers = #tpu.dot_dimension_numbers<[1], [0], [0], [1], [0, 0, 1, 1], [], []>} : vector<32x128xf32>, vector<128x384xf32>, vector<32x384xf32> -> vector<32x384xf32>
    %6 = arith.addf %2, %5 : vector<32x384xf32>
    %c0_8 = arith.constant 0 : index
    %c0_9 = arith.constant 0 : index
    %7 = vector.load %arg3[%c0_8, %c0_9] : memref<32x128xf32, #tpu.memory_space<vmem>>, vector<32x128xf32>
    %c0_10 = arith.constant 0 : index
    %c0_11 = arith.constant 0 : index
    %8 = vector.load %arg7[%c0_10, %c0_11] : memref<128x384xf32, #tpu.memory_space<vmem>>, vector<128x384xf32>
    %cst_12 = arith.constant dense<0.000000e+00> : vector<32x384xf32>
    %9 = tpu.matmul %7, %8, %cst_12 {dimension_numbers = #tpu.dot_dimension_numbers<[1], [0], [0], [1], [0, 0, 1, 1], [], []>} : vector<32x128xf32>, vector<128x384xf32>, vector<32x384xf32> -> vector<32x384xf32>
    %10 = arith.addf %6, %9 : vector<32x384xf32>
    %c0_13 = arith.constant 0 : index
    %c0_14 = arith.constant 0 : index
    %11 = vector.load %arg8[%c0_13, %c0_14] : memref<1x384xf32, #tpu.memory_space<vmem>>, vector<1x384xf32>
    %12 = vector.broadcast %11 : vector<1x384xf32> to vector<32x384xf32>
    %13 = arith.addf %10, %12 : vector<32x384xf32>
    %c0_15 = arith.constant 0 : index
    %c0_16 = arith.constant 0 : index
    %14 = vector.load %arg4[%c0_15, %c0_16] : memref<32x384xf32, #tpu.memory_space<vmem>>, vector<32x384xf32>
    %15 = arith.addf %13, %14 : vector<32x384xf32>
    %c0_17 = arith.constant 0 : index
    %c0_18 = arith.constant 0 : index
    %16 = vector.load %arg9[%c0_17, %c0_18] : memref<32x384xf32, #tpu.memory_space<vmem>>, vector<32x384xf32>
    tpu.vector_store %arg9[%c0_17, %c0_18], %15 {strides = array<i32>} : memref<32x384xf32, #tpu.memory_space<vmem>>, vector<32x384xf32>,
    return
  }
  func.func @transform_0(%arg0: i32) -> (i32, i32) {
    %c0_i32 = arith.constant 0 : i32
    %c0_i32_0 = arith.constant 0 : i32
    return %arg0, %c0_i32 : i32, i32
  }
  func.func @transform_1(%arg0: i32) -> (i32, i32) {
    %c0_i32 = arith.constant 0 : i32
    %c0_i32_0 = arith.constant 0 : i32
    return %arg0, %c0_i32 : i32, i32
  }
  func.func @transform_2(%arg0: i32) -> (i32, i32) {
    %c0_i32 = arith.constant 0 : i32
    %c0_i32_0 = arith.constant 0 : i32
    return %arg0, %c0_i32 : i32, i32
  }
  func.func @transform_3(%arg0: i32) -> (i32, i32) {
    %c0_i32 = arith.constant 0 : i32
    %c0_i32_0 = arith.constant 0 : i32
    return %arg0, %c0_i32 : i32, i32
  }
  func.func @transform_4(%arg0: i32) -> (i32, i32) {
    %c0_i32 = arith.constant 0 : i32
    %c0_i32_0 = arith.constant 0 : i32
    %c0_i32_1 = arith.constant 0 : i32
    return %c0_i32, %c0_i32_0 : i32, i32
  }
  func.func @transform_5(%arg0: i32) -> (i32, i32) {
    %c0_i32 = arith.constant 0 : i32
    %c0_i32_0 = arith.constant 0 : i32
    %c0_i32_1 = arith.constant 0 : i32
    return %c0_i32, %c0_i32_0 : i32, i32
  }
  func.func @transform_6(%arg0: i32) -> (i32, i32) {
    %c0_i32 = arith.constant 0 : i32
    %c0_i32_0 = arith.constant 0 : i32
    %c0_i32_1 = arith.constant 0 : i32
    return %c0_i32, %c0_i32_0 : i32, i32
  }
  func.func @transform_7(%arg0: i32) -> (i32, i32) {
    %c0_i32 = arith.constant 0 : i32
    %c0_i32_0 = arith.constant 0 : i32
    %c0_i32_1 = arith.constant 0 : i32
    return %c0_i32, %c0_i32_0 : i32, i32
  }
  func.func @transform_8(%arg0: i32) -> (i32, i32) {
    %c0_i32 = arith.constant 0 : i32
    %c0_i32_0 = arith.constant 0 : i32
    return %arg0, %c0_i32 : i32, i32
  }
}

</mosaic_0001>

<llo_original>
// kernel: tpu_custom_call.1
$region0: #{tpu_custom_call.1}
  #allocation0 [shape = 'u32[]', space=smem, size = 0x4, offset = 0x4, fixed_abs, tag = 'smem constant byte address 0x4 - core index']
  #allocation1 [shape = 'u32[144,128]{1,0:T(1,128)}', space=vmem, size = 0x12000, scoped, tag = 'internal scratch']
  %s0 = inlined_call_operand.hbm [shape: f32[32,128], index: 0, kind: input, shape index: {}]
  %s1 = inlined_call_operand.hbm [shape: f32[32,128], index: 1, kind: input, shape index: {}]
  %s2 = inlined_call_operand.hbm [shape: f32[32,128], index: 2, kind: input, shape index: {}]
  %s3 = inlined_call_operand.hbm [shape: f32[32,384], index: 3, kind: input, shape index: {}]
  %s4 = inlined_call_operand.hbm [shape: f32[128,384], index: 4, kind: input, shape index: {}]
  %s5 = inlined_call_operand.hbm [shape: f32[128,384], index: 5, kind: input, shape index: {}]
  %s6 = inlined_call_operand.hbm [shape: f32[128,384], index: 6, kind: input, shape index: {}]
  %s7 = inlined_call_operand.vmem [shape: f32[1,384], index: 7, kind: input, shape index: {}]
  %s8 = inlined_call_operand.hbm [shape: f32[32,384], index: 8, kind: output, shape index: {}]
  %s9 = sld [smem:[#allocation0]]
  $region70: #{tpu_custom_call.1} parent=0
    _
  %s11 = ssub.s32 1, %s9
  %s12 = scalar_select 0, %s11, %s9
  $region1: #{tpu_custom_call.1} parent=0
    #allocation2 [shape = 'u8[16384]{0}', space=vmem, size = 0x4000, scoped, tag = 'input window, operand 0, single buffered']
    #allocation3 [shape = 's32[1]{0}', space=sflag, size = 0x4, scoped, tag = 'scoped memory for tpu_custom_call.1']
    #allocation4 [shape = 's32[1]{0}', space=sflag, size = 0x4, scoped, tag = 'scoped memory for tpu_custom_call.1']
    #allocation5 [shape = 'u8[16384]{0}', space=vmem, size = 0x4000, scoped, tag = 'input window, operand 1, single buffered']
    #allocation6 [shape = 's32[1]{0}', space=sflag, size = 0x4, scoped, tag = 'scoped memory for tpu_custom_call.1']
    #allocation7 [shape = 'u8[16384]{0}', space=vmem, size = 0x4000, scoped, tag = 'input window, operand 2, single buffered']
    #allocation8 [shape = 'u8[49152]{0}', space=vmem, size = 0xc000, scoped, tag = 'input window, operand 3, single buffered']
    #allocation9 [shape = 's32[1]{0}', space=sflag, size = 0x4, scoped, tag = 'scoped memory for tpu_custom_call.1']
    #allocation10 [shape = 'u8[196608]{0}', space=vmem, size = 0x30000, scoped, tag = 'input window, operand 4, single buffered']
    #allocation11 [shape = 'u8[196608]{0}', space=vmem, size = 0x30000, scoped, tag = 'input window, operand 5, single buffered']
    #allocation12 [shape = 's32[1]{0}', space=sflag, size = 0x4, scoped, tag = 'scoped memory for tpu_custom_call.1']
    #allocation13 [shape = 'u8[196608]{0}', space=vmem, size = 0x30000, scoped, tag = 'input window, operand 6, single buffered']
    #allocation14 [shape = 'u8[49152]{0}', space=vmem, size = 0xc000, scoped, tag = 'output window, operand 0, single buffered']
    %13 = vsyncpa [#allocation3], 0
    %14 = vsyncpa [#allocation6], 0
    %15 = vsyncpa [#allocation9], 0
    %16 = vsyncpa [#allocation12], 0
    %17 = vsyncpa [#allocation4], 0
    // Predicated region
    $region2: #{tpu_custom_call.1} parent=1 // pred_check
      _
    $region3: #{tpu_custom_call.1} parent=1 // pred_check_branch
      %19 = sbr.rel (0) target = $region5
    $region4: #{tpu_custom_call.1} parent=1 // pred_region
      %s21 = ssub.s32 512, 512
      %22 = vsyncadd [#allocation3], %s21
      %s23 = sshll.u32 [#allocation2], 4
      %s24 = int_to_ptr.vmem [resolvable:$true] %s23
      %29 = dma.hbm_to_vmem [thread:$0]  %s0, 512, %s24, [#allocation3], 128, 128, 8
    $region5: #{tpu_custom_call.1} parent=1 // pred_fallthru
      _
    // Predicated region
    $region6: #{tpu_custom_call.1} parent=1 // pred_check
      _
    $region7: #{tpu_custom_call.1} parent=1 // pred_check_branch
      %31 = sbr.rel (0) target = $region9
    $region8: #{tpu_custom_call.1} parent=1 // pred_region
      %s33 = ssub.s32 512, 512
      %34 = vsyncadd [#allocation6], %s33
      %s35 = sshll.u32 [#allocation5], 4
      %s36 = int_to_ptr.vmem [resolvable:$true] %s35
      %41 = dma.hbm_to_vmem [thread:$0]  %s1, 512, %s36, [#allocation6], 128, 128, 8
    $region9: #{tpu_custom_call.1} parent=1 // pred_fallthru
      _
    // Predicated region
    $region10: #{tpu_custom_call.1} parent=1 // pred_check
      _
    $region11: #{tpu_custom_call.1} parent=1 // pred_check_branch
      %43 = sbr.rel (0) target = $region13
    $region12: #{tpu_custom_call.1} parent=1 // pred_region
      %s45 = ssub.s32 512, 512
      %46 = vsyncadd [#allocation6], %s45
      %s47 = sshll.u32 [#allocation7], 4
      %s48 = int_to_ptr.vmem [resolvable:$true] %s47
      %53 = dma.hbm_to_vmem [thread:$0]  %s2, 512, %s48, [#allocation6], 128, 128, 8
    $region13: #{tpu_custom_call.1} parent=1 // pred_fallthru
      _
    // Predicated region
    $region14: #{tpu_custom_call.1} parent=1 // pred_check
      _
    $region15: #{tpu_custom_call.1} parent=1 // pred_check_branch
      %55 = sbr.rel (0) target = $region17
    $region16: #{tpu_custom_call.1} parent=1 // pred_region
      %s57 = ssub.s32 1536, 1536
      %58 = vsyncadd [#allocation9], %s57
      %s59 = sshll.u32 [#allocation8], 4
      %s60 = int_to_ptr.vmem [resolvable:$true] %s59
      %65 = dma.hbm_to_vmem [thread:$0]  %s3, 1536, %s60, [#allocation9], 384, 384, 24
    $region17: #{tpu_custom_call.1} parent=1 // pred_fallthru
      _
    // Predicated region
    $region18: #{tpu_custom_call.1} parent=1 // pred_check
      _
    $region19: #{tpu_custom_call.1} parent=1 // pred_check_branch
      %67 = sbr.rel (0) target = $region21
    $region20: #{tpu_custom_call.1} parent=1 // pred_region
      %s69 = ssub.s32 6144, 6144
      %70 = vsyncadd [#allocation9], %s69
      %s71 = sshll.u32 [#allocation10], 4
      %s72 = int_to_ptr.vmem [resolvable:$true] %s71
      %77 = dma.hbm_to_vmem [thread:$0]  %s4, 6144, %s72, [#allocation9], 384, 384, 24
    $region21: #{tpu_custom_call.1} parent=1 // pred_fallthru
      _
    // Predicated region
    $region22: #{tpu_custom_call.1} parent=1 // pred_check
      _
    $region23: #{tpu_custom_call.1} parent=1 // pred_check_branch
      %79 = sbr.rel (0) target = $region25
    $region24: #{tpu_custom_call.1} parent=1 // pred_region
      %s81 = ssub.s32 6144, 6144
      %82 = vsyncadd [#allocation12], %s81
      %s83 = sshll.u32 [#allocation11], 4
      %s84 = int_to_ptr.vmem [resolvable:$true] %s83
      %89 = dma.hbm_to_vmem [thread:$0]  %s5, 6144, %s84, [#allocation12], 384, 384, 24
    $region25: #{tpu_custom_call.1} parent=1 // pred_fallthru
      _
    // Predicated region
    $region26: #{tpu_custom_call.1} parent=1 // pred_check
      _
    $region27: #{tpu_custom_call.1} parent=1 // pred_check_branch
      %91 = sbr.rel (0) target = $region29
    $region28: #{tpu_custom_call.1} parent=1 // pred_region
      %s93 = ssub.s32 6144, 6144
      %94 = vsyncadd [#allocation12], %s93
      %s95 = sshll.u32 [#allocation13], 4
      %s96 = int_to_ptr.vmem [resolvable:$true] %s95
      %101 = dma.hbm_to_vmem [thread:$0]  %s6, 6144, %s96, [#allocation12], 384, 384, 24
    $region29: #{tpu_custom_call.1} parent=1 // pred_fallthru
      _
    // Predicated region
    $region30: #{tpu_custom_call.1} parent=1 // pred_check
      _
    $region31: #{tpu_custom_call.1} parent=1 // pred_check_branch
      %103 = sbr.rel (0) target = $region33
    $region32: #{tpu_custom_call.1} parent=1 // pred_region
      _
    $region33: #{tpu_custom_call.1} parent=1 // pred_fallthru
      _
    // Predicated region
    $region34: #{tpu_custom_call.1} parent=1 // pred_check
      _
    $region35: #{tpu_custom_call.1} parent=1 // pred_check_branch
      %105 = sbr.rel (0) target = $region37
    $region36: #{tpu_custom_call.1} parent=1 // pred_region
      %106 = dma.done [#allocation3], 512
    $region37: #{tpu_custom_call.1} parent=1 // pred_fallthru
      _
    // Predicated region
    $region38: #{tpu_custom_call.1} parent=1 // pred_check
      _
    $region39: #{tpu_custom_call.1} parent=1 // pred_check_branch
      %108 = sbr.rel (0) target = $region41
    $region40: #{tpu_custom_call.1} parent=1 // pred_region
      %109 = dma.done [#allocation6], 512
    $region41: #{tpu_custom_call.1} parent=1 // pred_fallthru
      _
    // Predicated region
    $region42: #{tpu_custom_call.1} parent=1 // pred_check
      _
    $region43: #{tpu_custom_call.1} parent=1 // pred_check_branch
      %111 = sbr.rel (0) target = $region45
    $region44: #{tpu_custom_call.1} parent=1 // pred_region
      %112 = dma.done [#allocation6], 512
    $region45: #{tpu_custom_call.1} parent=1 // pred_fallthru
      _
    // Predicated region
    $region46: #{tpu_custom_call.1} parent=1 // pred_check
      _
    $region47: #{tpu_custom_call.1} parent=1 // pred_check_branch
      %114 = sbr.rel (0) target = $region49
    $region48: #{tpu_custom_call.1} parent=1 // pred_region
      %115 = dma.done [#allocation9], 1536
    $region49: #{tpu_custom_call.1} parent=1 // pred_fallthru
      _
    // Predicated region
    $region50: #{tpu_custom_call.1} parent=1 // pred_check
      _
    $region51: #{tpu_custom_call.1} parent=1 // pred_check_branch
      %117 = sbr.rel (0) target = $region53
    $region52: #{tpu_custom_call.1} parent=1 // pred_region
      %118 = dma.done [#allocation9], 6144
    $region53: #{tpu_custom_call.1} parent=1 // pred_fallthru
      _
    // Predicated region
    $region54: #{tpu_custom_call.1} parent=1 // pred_check
      _
    $region55: #{tpu_custom_call.1} parent=1 // pred_check_branch
      %120 = sbr.rel (0) target = $region57
    $region56: #{tpu_custom_call.1} parent=1 // pred_region
      %121 = dma.done [#allocation12], 6144
    $region57: #{tpu_custom_call.1} parent=1 // pred_fallthru
      _
    // Predicated region
    $region58: #{tpu_custom_call.1} parent=1 // pred_check
      _
    $region59: #{tpu_custom_call.1} parent=1 // pred_check_branch
      %123 = sbr.rel (0) target = $region61
    $region60: #{tpu_custom_call.1} parent=1 // pred_region
      %124 = dma.done [#allocation12], 6144
    $region61: #{tpu_custom_call.1} parent=1 // pred_fallthru
      _
    %v125 = vld [vmem:[#allocation2] sm:$0xff]
    %v126 = vld [vmem:[#allocation2 + $0x8] sm:$0xff]
    %v127 = vld [vmem:[#allocation2 + $0x10] sm:$0xff]
    %v128 = vld [vmem:[#allocation2 + $0x18] sm:$0xff]
    %v129 = vld [vmem:[#allocation10] sm:$0xff]
    %v130 = vld [vmem:[#allocation10 + $0x8] sm:$0xff]
    %v131 = vld [vmem:[#allocation10 + $0x10] sm:$0xff]
    %v132 = vld [vmem:[#allocation10 + $0x18] sm:$0xff]
    %v133 = vld [vmem:[#allocation10 + $0x20] sm:$0xff]
    %v134 = vld [vmem:[#allocation10 + $0x28] sm:$0xff]
    %v135 = vld [vmem:[#allocation10 + $0x30] sm:$0xff]
    %v136 = vld [vmem:[#allocation10 + $0x38] sm:$0xff]
    %v137 = vld [vmem:[#allocation10 + $0x40] sm:$0xff]
    %v138 = vld [vmem:[#allocation10 + $0x48] sm:$0xff]
    %v139 = vld [vmem:[#allocation10 + $0x50] sm:$0xff]
    %v140 = vld [vmem:[#allocation10 + $0x58] sm:$0xff]
    %v141 = vld [vmem:[#allocation10 + $0x60] sm:$0xff]
    %v142 = vld [vmem:[#allocation10 + $0x68] sm:$0xff]
    %v143 = vld [vmem:[#allocation10 + $0x70] sm:$0xff]
    %v144 = vld [vmem:[#allocation10 + $0x78] sm:$0xff]
    %v145 = vld [vmem:[#allocation10 + $0x80] sm:$0xff]
    %v146 = vld [vmem:[#allocation10 + $0x88] sm:$0xff]
    %v147 = vld [vmem:[#allocation10 + $0x90] sm:$0xff]
    %v148 = vld [vmem:[#allocation10 + $0x98] sm:$0xff]
    %v149 = vld [vmem:[#allocation10 + $0xa0] sm:$0xff]
    %v150 = vld [vmem:[#allocation10 + $0xa8] sm:$0xff]
    %v151 = vld [vmem:[#allocation10 + $0xb0] sm:$0xff]
    %v152 = vld [vmem:[#allocation10 + $0xb8] sm:$0xff]
    %v153 = vld [vmem:[#allocation10 + $0xc0] sm:$0xff]
    %v154 = vld [vmem:[#allocation10 + $0xc8] sm:$0xff]
    %v155 = vld [vmem:[#allocation10 + $0xd0] sm:$0xff]
    %v156 = vld [vmem:[#allocation10 + $0xd8] sm:$0xff]
    %v157 = vld [vmem:[#allocation10 + $0xe0] sm:$0xff]
    %v158 = vld [vmem:[#allocation10 + $0xe8] sm:$0xff]
    %v159 = vld [vmem:[#allocation10 + $0xf0] sm:$0xff]
    %v160 = vld [vmem:[#allocation10 + $0xf8] sm:$0xff]
    %v161 = vld [vmem:[#allocation10 + $0x100] sm:$0xff]
    %v162 = vld [vmem:[#allocation10 + $0x108] sm:$0xff]
    %v163 = vld [vmem:[#allocation10 + $0x110] sm:$0xff]
    %v164 = vld [vmem:[#allocation10 + $0x118] sm:$0xff]
    %v165 = vld [vmem:[#allocation10 + $0x120] sm:$0xff]
    %v166 = vld [vmem:[#allocation10 + $0x128] sm:$0xff]
    %v167 = vld [vmem:[#allocation10 + $0x130] sm:$0xff]
    %v168 = vld [vmem:[#allocation10 + $0x138] sm:$0xff]
    %v169 = vld [vmem:[#allocation10 + $0x140] sm:$0xff]
    %v170 = vld [vmem:[#allocation10 + $0x148] sm:$0xff]
    %v171 = vld [vmem:[#allocation10 + $0x150] sm:$0xff]
    %v172 = vld [vmem:[#allocation10 + $0x158] sm:$0xff]
    %v173 = vld [vmem:[#allocation10 + $0x160] sm:$0xff]
    %v174 = vld [vmem:[#allocation10 + $0x168] sm:$0xff]
    %v175 = vld [vmem:[#allocation10 + $0x170] sm:$0xff]
    %v176 = vld [vmem:[#allocation10 + $0x178] sm:$0xff]
    %v177 = vld [vmem:[#allocation5] sm:$0xff]
    %v178 = vld [vmem:[#allocation5 + $0x8] sm:$0xff]
    %v179 = vld [vmem:[#allocation5 + $0x10] sm:$0xff]
    %v180 = vld [vmem:[#allocation5 + $0x18] sm:$0xff]
    %v181 = vld [vmem:[#allocation11] sm:$0xff]
    %v182 = vld [vmem:[#allocation11 + $0x8] sm:$0xff]
    %v183 = vld [vmem:[#allocation11 + $0x10] sm:$0xff]
    %v184 = vld [vmem:[#allocation11 + $0x18] sm:$0xff]
    %v185 = vld [vmem:[#allocation11 + $0x20] sm:$0xff]
    %v186 = vld [vmem:[#allocation11 + $0x28] sm:$0xff]
    %v187 = vld [vmem:[#allocation11 + $0x30] sm:$0xff]
    %v188 = vld [vmem:[#allocation11 + $0x38] sm:$0xff]
    %v189 = vld [vmem:[#allocation11 + $0x40] sm:$0xff]
    %v190 = vld [vmem:[#allocation11 + $0x48] sm:$0xff]
    %v191 = vld [vmem:[#allocation11 + $0x50] sm:$0xff]
    %v192 = vld [vmem:[#allocation11 + $0x58] sm:$0xff]
    %v193 = vld [vmem:[#allocation11 + $0x60] sm:$0xff]
    %v194 = vld [vmem:[#allocation11 + $0x68] sm:$0xff]
    %v195 = vld [vmem:[#allocation11 + $0x70] sm:$0xff]
    %v196 = vld [vmem:[#allocation11 + $0x78] sm:$0xff]
    %v197 = vld [vmem:[#allocation11 + $0x80] sm:$0xff]
    %v198 = vld [vmem:[#allocation11 + $0x88] sm:$0xff]
    %v199 = vld [vmem:[#allocation11 + $0x90] sm:$0xff]
    %v200 = vld [vmem:[#allocation11 + $0x98] sm:$0xff]
    %v201 = vld [vmem:[#allocation11 + $0xa0] sm:$0xff]
    %v202 = vld [vmem:[#allocation11 + $0xa8] sm:$0xff]
    %v203 = vld [vmem:[#allocation11 + $0xb0] sm:$0xff]
    %v204 = vld [vmem:[#allocation11 + $0xb8] sm:$0xff]
    %v205 = vld [vmem:[#allocation11 + $0xc0] sm:$0xff]
    %v206 = vld [vmem:[#allocation11 + $0xc8] sm:$0xff]
    %v207 = vld [vmem:[#allocation11 + $0xd0] sm:$0xff]
    %v208 = vld [vmem:[#allocation11 + $0xd8] sm:$0xff]
    %v209 = vld [vmem:[#allocation11 + $0xe0] sm:$0xff]
    %v210 = vld [vmem:[#allocation11 + $0xe8] sm:$0xff]
    %v211 = vld [vmem:[#allocation11 + $0xf0] sm:$0xff]
    %v212 = vld [vmem:[#allocation11 + $0xf8] sm:$0xff]
    %v213 = vld [vmem:[#allocation11 + $0x100] sm:$0xff]
    %v214 = vld [vmem:[#allocation11 + $0x108] sm:$0xff]
    %v215 = vld [vmem:[#allocation11 + $0x110] sm:$0xff]
    %v216 = vld [vmem:[#allocation11 + $0x118] sm:$0xff]
    %v217 = vld [vmem:[#allocation11 + $0x120] sm:$0xff]
    %v218 = vld [vmem:[#allocation11 + $0x128] sm:$0xff]
    %v219 = vld [vmem:[#allocation11 + $0x130] sm:$0xff]
    %v220 = vld [vmem:[#allocation11 + $0x138] sm:$0xff]
    %v221 = vld [vmem:[#allocation11 + $0x140] sm:$0xff]
    %v222 = vld [vmem:[#allocation11 + $0x148] sm:$0xff]
    %v223 = vld [vmem:[#allocation11 + $0x150] sm:$0xff]
    %v224 = vld [vmem:[#allocation11 + $0x158] sm:$0xff]
    %v225 = vld [vmem:[#allocation11 + $0x160] sm:$0xff]
    %v226 = vld [vmem:[#allocation11 + $0x168] sm:$0xff]
    %v227 = vld [vmem:[#allocation11 + $0x170] sm:$0xff]
    %v228 = vld [vmem:[#allocation11 + $0x178] sm:$0xff]
    %229 = vmatprep.subr.mxu0 %v182
    %230 = vmatpush1.msra.mxu0 %v181
    %231 = vmatprep.subr.mxu0 %v185
    %232 = vmatpush1.msra.mxu0 %v184
    %233 = vmatprep.subr.mxu0 %v188
    %234 = vmatpush1.msra.mxu0 %v187
    %235 = vmatprep.subr.mxu0 %v191
    %236 = vmatpush1.msra.mxu0 %v190
    %237 = vmatprep.subr.mxu0 %v194
    %238 = vmatpush1.msra.mxu0 %v193
    %239 = vmatprep.subr.mxu0 %v197
    %240 = vmatpush1.msra.mxu0 %v196
    %241 = vmatprep.subr.mxu0 %v200
    %242 = vmatpush1.msra.mxu0 %v199
    %243 = vmatprep.subr.mxu0 %v203
    %244 = vmatpush1.msra.mxu0 %v202
    %245 = vmatprep.subr.mxu0 %v206
    %246 = vmatpush1.msra.mxu0 %v205
    %247 = vmatprep.subr.mxu0 %v209
    %248 = vmatpush1.msra.mxu0 %v208
    %249 = vmatprep.subr.mxu0 %v212
    %250 = vmatpush1.msra.mxu0 %v211
    %251 = vmatprep.subr.mxu0 %v215
    %252 = vmatpush1.msra.mxu0 %v214
    %253 = vmatprep.subr.mxu0 %v218
    %254 = vmatpush1.msra.mxu0 %v217
    %255 = vmatprep.subr.mxu0 %v221
    %256 = vmatpush1.msra.mxu0 %v220
    %257 = vmatprep.subr.mxu0 %v224
    %258 = vmatpush1.msra.mxu0 %v223
    %259 = vmatprep.subr.mxu0 %v227
    %260 = vmatpush1.msra.mxu0 %v226
    %261 = vmatprep.subr.mxu0 0.0
    %262 = vmatpush1.msra.mxu0 0.0
    %263 = vmatprep.subr.mxu0 0.0
    %264 = vmatpush1.msra.mxu0 0.0
    %265 = vmatprep.subr.mxu0 0.0
    %266 = vmatpush1.msra.mxu0 0.0
    %267 = vmatprep.subr.mxu0 0.0
    %268 = vmatpush1.msra.mxu0 0.0
    %269 = vmatprep.subr.mxu0 0.0
    %270 = vmatpush1.msra.mxu0 0.0
    %271 = vmatprep.subr.mxu0 0.0
    %272 = vmatpush1.msra.mxu0 0.0
    %273 = vmatprep.subr.mxu0 0.0
    %274 = vmatpush1.msra.mxu0 0.0
    %275 = vmatprep.subr.mxu0 0.0
    %276 = vmatpush1.msra.mxu0 0.0
    %277 = vmatprep.subr.mxu0 0.0
    %278 = vmatpush1.msra.mxu0 0.0
    %279 = vmatprep.subr.mxu0 0.0
    %280 = vmatpush1.msra.mxu0 0.0
    %281 = vmatprep.subr.mxu0 0.0
    %282 = vmatpush1.msra.mxu0 0.0
    %283 = vmatprep.subr.mxu0 0.0
    %284 = vmatpush1.msra.mxu0 0.0
    %285 = vmatprep.subr.mxu0 0.0
    %286 = vmatpush1.msra.mxu0 0.0
    %287 = vmatprep.subr.mxu0 0.0
    %288 = vmatpush1.msra.mxu0 0.0
    %289 = vmatprep.subr.mxu0 0.0
    %290 = vmatpush1.msra.mxu0 0.0
    %291 = vmatprep.subr.mxu0 0.0
    %292 = vmatpush1.msra.mxu0 0.0
    %293 = vmatprep.mubr.f32.mxu0 0.0
    %294 = vmatmul.mubr.f32.gmra.mrb[0].mxu0 %v177
    %v295 = vpop.f32.mrb[0].mxu0
    %v296 = vadd.f32 0.0, %v295
    %v297 = vpop.f32.mrb[0].mxu0
    %v298 = vadd.f32 0.0, %v297
    %299 = vmatprep.mubr.f32.mxu0 0.0
    %300 = vmatmul.mubr.f32.gmra.mrb[0].mxu0 %v178
    %v301 = vpop.f32.mrb[0].mxu0
    %v302 = vadd.f32 0.0, %v301
    %v303 = vpop.f32.mrb[0].mxu0
    %v304 = vadd.f32 0.0, %v303
    %305 = vmatprep.mubr.f32.mxu0 0.0
    %306 = vmatmul.mubr.f32.gmra.mrb[0].mxu0 %v179
    %v307 = vpop.f32.mrb[0].mxu0
    %v308 = vadd.f32 0.0, %v307
    %v309 = vpop.f32.mrb[0].mxu0
    %v310 = vadd.f32 0.0, %v309
    %311 = vmatprep.mubr.f32.mxu0 0.0
    %312 = vmatmul.mubr.f32.gmra.mrb[0].mxu0 %v180
    %v313 = vpop.f32.mrb[0].mxu0
    %v314 = vadd.f32 0.0, %v313
    %v315 = vpop.f32.mrb[0].mxu0
    %v316 = vadd.f32 0.0, %v315
    %317 = vdwg.mxu0
    %318 = vmatprep.subr.mxu0 0.0
    %319 = vmatpush1.msra.mxu0 %v183
    %320 = vmatprep.subr.mxu0 0.0
    %321 = vmatpush1.msra.mxu0 %v186
    %322 = vmatprep.subr.mxu0 0.0
    %323 = vmatpush1.msra.mxu0 %v189
    %324 = vmatprep.subr.mxu0 0.0
    %325 = vmatpush1.msra.mxu0 %v192
    %326 = vmatprep.subr.mxu0 0.0
    %327 = vmatpush1.msra.mxu0 %v195
    %328 = vmatprep.subr.mxu0 0.0
    %329 = vmatpush1.msra.mxu0 %v198
    %330 = vmatprep.subr.mxu0 0.0
    %331 = vmatpush1.msra.mxu0 %v201
    %332 = vmatprep.subr.mxu0 0.0
    %333 = vmatpush1.msra.mxu0 %v204
    %334 = vmatprep.subr.mxu0 0.0
    %335 = vmatpush1.msra.mxu0 %v207
    %336 = vmatprep.subr.mxu0 0.0
    %337 = vmatpush1.msra.mxu0 %v210
    %338 = vmatprep.subr.mxu0 0.0
    %339 = vmatpush1.msra.mxu0 %v213
    %340 = vmatprep.subr.mxu0 0.0
    %341 = vmatpush1.msra.mxu0 %v216
    %342 = vmatprep.subr.mxu0 0.0
    %343 = vmatpush1.msra.mxu0 %v219
    %344 = vmatprep.subr.mxu0 0.0
    %345 = vmatpush1.msra.mxu0 %v222
    %346 = vmatprep.subr.mxu0 0.0
    %347 = vmatpush1.msra.mxu0 %v225
    %348 = vmatprep.subr.mxu0 0.0
    %349 = vmatpush1.msra.mxu0 %v228
    %350 = vmatprep.subr.mxu0 0.0
    %351 = vmatpush1.msra.mxu0 0.0
    %352 = vmatprep.subr.mxu0 0.0
    %353 = vmatpush1.msra.mxu0 0.0
    %354 = vmatprep.subr.mxu0 0.0
    %355 = vmatpush1.msra.mxu0 0.0
    %356 = vmatprep.subr.mxu0 0.0
    %357 = vmatpush1.msra.mxu0 0.0
    %358 = vmatprep.subr.mxu0 0.0
    %359 = vmatpush1.msra.mxu0 0.0
    %360 = vmatprep.subr.mxu0 0.0
    %361 = vmatpush1.msra.mxu0 0.0
    %362 = vmatprep.subr.mxu0 0.0
    %363 = vmatpush1.msra.mxu0 0.0
    %364 = vmatprep.subr.mxu0 0.0
    %365 = vmatpush1.msra.mxu0 0.0
    %366 = vmatprep.subr.mxu0 0.0
    %367 = vmatpush1.msra.mxu0 0.0
    %368 = vmatprep.subr.mxu0 0.0
    %369 = vmatpush1.msra.mxu0 0.0
    %370 = vmatprep.subr.mxu0 0.0
    %371 = vmatpush1.msra.mxu0 0.0
    %372 = vmatprep.subr.mxu0 0.0
    %373 = vmatpush1.msra.mxu0 0.0
    %374 = vmatprep.subr.mxu0 0.0
    %375 = vmatpush1.msra.mxu0 0.0
    %376 = vmatprep.subr.mxu0 0.0
    %377 = vmatpush1.msra.mxu0 0.0
    %378 = vmatprep.subr.mxu0 0.0
    %379 = vmatpush1.msra.mxu0 0.0
    %380 = vmatprep.subr.mxu0 0.0
    %381 = vmatpush1.msra.mxu0 0.0
    %382 = vmatprep.mubr.f32.mxu0 0.0
    %383 = vmatmul.mubr.f32.gmra.mrb[0].mxu0 %v177
    %v384 = vpop.f32.mrb[0].mxu0
    %v385 = vadd.f32 0.0, %v384
    %v386 = vpop.f32.mrb[0].mxu0
    %387 = vmatprep.mubr.f32.mxu0 0.0
    %388 = vmatmul.mubr.f32.gmra.mrb[0].mxu0 %v178
    %v389 = vpop.f32.mrb[0].mxu0
    %v390 = vadd.f32 0.0, %v389
    %v391 = vpop.f32.mrb[0].mxu0
    %392 = vmatprep.mubr.f32.mxu0 0.0
    %393 = vmatmul.mubr.f32.gmra.mrb[0].mxu0 %v179
    %v394 = vpop.f32.mrb[0].mxu0
    %v395 = vadd.f32 0.0, %v394
    %v396 = vpop.f32.mrb[0].mxu0
    %397 = vmatprep.mubr.f32.mxu0 0.0
    %398 = vmatmul.mubr.f32.gmra.mrb[0].mxu0 %v180
    %v399 = vpop.f32.mrb[0].mxu0
    %v400 = vadd.f32 0.0, %v399
    %v401 = vpop.f32.mrb[0].mxu0
    %402 = vdwg.mxu0
    %403 = vmatprep.subr.mxu0 %v130
    %404 = vmatpush1.msra.mxu0 %v129
    %405 = vmatprep.subr.mxu0 %v133
    %406 = vmatpush1.msra.mxu0 %v132
    %407 = vmatprep.subr.mxu0 %v136
    %408 = vmatpush1.msra.mxu0 %v135
    %409 = vmatprep.subr.mxu0 %v139
    %410 = vmatpush1.msra.mxu0 %v138
    %411 = vmatprep.subr.mxu0 %v142
    %412 = vmatpush1.msra.mxu0 %v141
    %413 = vmatprep.subr.mxu0 %v145
    %414 = vmatpush1.msra.mxu0 %v144
    %415 = vmatprep.subr.mxu0 %v148
    %416 = vmatpush1.msra.mxu0 %v147
    %417 = vmatprep.subr.mxu0 %v151
    %418 = vmatpush1.msra.mxu0 %v150
    %419 = vmatprep.subr.mxu0 %v154
    %420 = vmatpush1.msra.mxu0 %v153
    %421 = vmatprep.subr.mxu0 %v157
    %422 = vmatpush1.msra.mxu0 %v156
    %423 = vmatprep.subr.mxu0 %v160
    %424 = vmatpush1.msra.mxu0 %v159
    %425 = vmatprep.subr.mxu0 %v163
    %426 = vmatpush1.msra.mxu0 %v162
    %427 = vmatprep.subr.mxu0 %v166
    %428 = vmatpush1.msra.mxu0 %v165
    %429 = vmatprep.subr.mxu0 %v169
    %430 = vmatpush1.msra.mxu0 %v168
    %431 = vmatprep.subr.mxu0 %v172
    %432 = vmatpush1.msra.mxu0 %v171
    %433 = vmatprep.subr.mxu0 %v175
    %434 = vmatpush1.msra.mxu0 %v174
    %435 = vmatprep.subr.mxu0 0.0
    %436 = vmatpush1.msra.mxu0 0.0
    %437 = vmatprep.subr.mxu0 0.0
    %438 = vmatpush1.msra.mxu0 0.0
    %439 = vmatprep.subr.mxu0 0.0
    %440 = vmatpush1.msra.mxu0 0.0
    %441 = vmatprep.subr.mxu0 0.0
    %442 = vmatpush1.msra.mxu0 0.0
    %443 = vmatprep.subr.mxu0 0.0
    %444 = vmatpush1.msra.mxu0 0.0
    %445 = vmatprep.subr.mxu0 0.0
    %446 = vmatpush1.msra.mxu0 0.0
    %447 = vmatprep.subr.mxu0 0.0
    %448 = vmatpush1.msra.mxu0 0.0
    %449 = vmatprep.subr.mxu0 0.0
    %450 = vmatpush1.msra.mxu0 0.0
    %451 = vmatprep.subr.mxu0 0.0
    %452 = vmatpush1.msra.mxu0 0.0
    %453 = vmatprep.subr.mxu0 0.0
    %454 = vmatpush1.msra.mxu0 0.0
    %455 = vmatprep.subr.mxu0 0.0
    %456 = vmatpush1.msra.mxu0 0.0
    %457 = vmatprep.subr.mxu0 0.0
    %458 = vmatpush1.msra.mxu0 0.0
    %459 = vmatprep.subr.mxu0 0.0
    %460 = vmatpush1.msra.mxu0 0.0
    %461 = vmatprep.subr.mxu0 0.0
    %462 = vmatpush1.msra.mxu0 0.0
    %463 = vmatprep.subr.mxu0 0.0
    %464 = vmatpush1.msra.mxu0 0.0
    %465 = vmatprep.subr.mxu0 0.0
    %466 = vmatpush1.msra.mxu0 0.0
    %467 = vmatprep.mubr.f32.mxu0 0.0
    %468 = vmatmul.mubr.f32.gmra.mrb[0].mxu0 %v125
    %v469 = vpop.f32.mrb[0].mxu0
    %v470 = vadd.f32 %v296, %v469
    %v471 = vpop.f32.mrb[0].mxu0
    %v472 = vadd.f32 %v298, %v471
    %473 = vmatprep.mubr.f32.mxu0 0.0
    %474 = vmatmul.mubr.f32.gmra.mrb[0].mxu0 %v126
    %v475 = vpop.f32.mrb[0].mxu0
    %v476 = vadd.f32 %v302, %v475
    %v477 = vpop.f32.mrb[0].mxu0
    %v478 = vadd.f32 %v304, %v477
    %479 = vmatprep.mubr.f32.mxu0 0.0
    %480 = vmatmul.mubr.f32.gmra.mrb[0].mxu0 %v127
    %v481 = vpop.f32.mrb[0].mxu0
    %v482 = vadd.f32 %v308, %v481
    %v483 = vpop.f32.mrb[0].mxu0
    %v484 = vadd.f32 %v310, %v483
    %485 = vmatprep.mubr.f32.mxu0 0.0
    %486 = vmatmul.mubr.f32.gmra.mrb[0].mxu0 %v128
    %v487 = vpop.f32.mrb[0].mxu0
    %v488 = vadd.f32 %v314, %v487
    %v489 = vpop.f32.mrb[0].mxu0
    %v490 = vadd.f32 %v316, %v489
    %491 = vdwg.mxu0
    %492 = vmatprep.subr.mxu0 0.0
    %493 = vmatpush1.msra.mxu0 %v131
    %494 = vmatprep.subr.mxu0 0.0
    %495 = vmatpush1.msra.mxu0 %v134
    %496 = vmatprep.subr.mxu0 0.0
    %497 = vmatpush1.msra.mxu0 %v137
    %498 = vmatprep.subr.mxu0 0.0
    %499 = vmatpush1.msra.mxu0 %v140
    %500 = vmatprep.subr.mxu0 0.0
    %501 = vmatpush1.msra.mxu0 %v143
    %502 = vmatprep.subr.mxu0 0.0
    %503 = vmatpush1.msra.mxu0 %v146
    %504 = vmatprep.subr.mxu0 0.0
    %505 = vmatpush1.msra.mxu0 %v149
    %506 = vmatprep.subr.mxu0 0.0
    %507 = vmatpush1.msra.mxu0 %v152
    %508 = vmatprep.subr.mxu0 0.0
    %509 = vmatpush1.msra.mxu0 %v155
    %510 = vmatprep.subr.mxu0 0.0
    %511 = vmatpush1.msra.mxu0 %v158
    %512 = vmatprep.subr.mxu0 0.0
    %513 = vmatpush1.msra.mxu0 %v161
    %514 = vmatprep.subr.mxu0 0.0
    %515 = vmatpush1.msra.mxu0 %v164
    %516 = vmatprep.subr.mxu0 0.0
    %517 = vmatpush1.msra.mxu0 %v167
    %518 = vmatprep.subr.mxu0 0.0
    %519 = vmatpush1.msra.mxu0 %v170
    %520 = vmatprep.subr.mxu0 0.0
    %521 = vmatpush1.msra.mxu0 %v173
    %522 = vmatprep.subr.mxu0 0.0
    %523 = vmatpush1.msra.mxu0 %v176
    %524 = vmatprep.subr.mxu0 0.0
    %525 = vmatpush1.msra.mxu0 0.0
    %526 = vmatprep.subr.mxu0 0.0
    %527 = vmatpush1.msra.mxu0 0.0
    %528 = vmatprep.subr.mxu0 0.0
    %529 = vmatpush1.msra.mxu0 0.0
    %530 = vmatprep.subr.mxu0 0.0
    %531 = vmatpush1.msra.mxu0 0.0
    %532 = vmatprep.subr.mxu0 0.0
    %533 = vmatpush1.msra.mxu0 0.0
    %534 = vmatprep.subr.mxu0 0.0
    %535 = vmatpush1.msra.mxu0 0.0
    %536 = vmatprep.subr.mxu0 0.0
    %537 = vmatpush1.msra.mxu0 0.0
    %538 = vmatprep.subr.mxu0 0.0
    %539 = vmatpush1.msra.mxu0 0.0
    %540 = vmatprep.subr.mxu0 0.0
    %541 = vmatpush1.msra.mxu0 0.0
    %542 = vmatprep.subr.mxu0 0.0
    %543 = vmatpush1.msra.mxu0 0.0
    %544 = vmatprep.subr.mxu0 0.0
    %545 = vmatpush1.msra.mxu0 0.0
    %546 = vmatprep.subr.mxu0 0.0
    %547 = vmatpush1.msra.mxu0 0.0
    %548 = vmatprep.subr.mxu0 0.0
    %549 = vmatpush1.msra.mxu0 0.0
    %550 = vmatprep.subr.mxu0 0.0
    %551 = vmatpush1.msra.mxu0 0.0
    %552 = vmatprep.subr.mxu0 0.0
    %553 = vmatpush1.msra.mxu0 0.0
    %554 = vmatprep.subr.mxu0 0.0
    %555 = vmatpush1.msra.mxu0 0.0
    %556 = vmatprep.mubr.f32.mxu0 0.0
    %557 = vmatmul.mubr.f32.gmra.mrb[0].mxu0 %v125
    %v558 = vpop.f32.mrb[0].mxu0
    %v559 = vadd.f32 %v385, %v558
    %v560 = vpop.f32.mrb[0].mxu0
    %561 = vmatprep.mubr.f32.mxu0 0.0
    %562 = vmatmul.mubr.f32.gmra.mrb[0].mxu0 %v126
    %v563 = vpop.f32.mrb[0].mxu0
    %v564 = vadd.f32 %v390, %v563
    %v565 = vpop.f32.mrb[0].mxu0
    %566 = vmatprep.mubr.f32.mxu0 0.0
    %567 = vmatmul.mubr.f32.gmra.mrb[0].mxu0 %v127
    %v568 = vpop.f32.mrb[0].mxu0
    %v569 = vadd.f32 %v395, %v568
    %v570 = vpop.f32.mrb[0].mxu0
    %571 = vmatprep.mubr.f32.mxu0 0.0
    %572 = vmatmul.mubr.f32.gmra.mrb[0].mxu0 %v128
    %v573 = vpop.f32.mrb[0].mxu0
    %v574 = vadd.f32 %v400, %v573
    %v575 = vpop.f32.mrb[0].mxu0
    %576 = vdwg.mxu0
    %v577 = vld [vmem:[#allocation7] sm:$0xff]
    %v578 = vld [vmem:[#allocation7 + $0x8] sm:$0xff]
    %v579 = vld [vmem:[#allocation7 + $0x10] sm:$0xff]
    %v580 = vld [vmem:[#allocation7 + $0x18] sm:$0xff]
    %v581 = vld [vmem:[#allocation13] sm:$0xff]
    %v582 = vld [vmem:[#allocation13 + $0x8] sm:$0xff]
    %v583 = vld [vmem:[#allocation13 + $0x10] sm:$0xff]
    %v584 = vld [vmem:[#allocation13 + $0x18] sm:$0xff]
    %v585 = vld [vmem:[#allocation13 + $0x20] sm:$0xff]
    %v586 = vld [vmem:[#allocation13 + $0x28] sm:$0xff]
    %v587 = vld [vmem:[#allocation13 + $0x30] sm:$0xff]
    %v588 = vld [vmem:[#allocation13 + $0x38] sm:$0xff]
    %v589 = vld [vmem:[#allocation13 + $0x40] sm:$0xff]
    %v590 = vld [vmem:[#allocation13 + $0x48] sm:$0xff]
    %v591 = vld [vmem:[#allocation13 + $0x50] sm:$0xff]
    %v592 = vld [vmem:[#allocation13 + $0x58] sm:$0xff]
    %v593 = vld [vmem:[#allocation13 + $0x60] sm:$0xff]
    %v594 = vld [vmem:[#allocation13 + $0x68] sm:$0xff]
    %v595 = vld [vmem:[#allocation13 + $0x70] sm:$0xff]
    %v596 = vld [vmem:[#allocation13 + $0x78] sm:$0xff]
    %v597 = vld [vmem:[#allocation13 + $0x80] sm:$0xff]
    %v598 = vld [vmem:[#allocation13 + $0x88] sm:$0xff]
    %v599 = vld [vmem:[#allocation13 + $0x90] sm:$0xff]
    %v600 = vld [vmem:[#allocation13 + $0x98] sm:$0xff]
    %v601 = vld [vmem:[#allocation13 + $0xa0] sm:$0xff]
    %v602 = vld [vmem:[#allocation13 + $0xa8] sm:$0xff]
    %v603 = vld [vmem:[#allocation13 + $0xb0] sm:$0xff]
    %v604 = vld [vmem:[#allocation13 + $0xb8] sm:$0xff]
    %v605 = vld [vmem:[#allocation13 + $0xc0] sm:$0xff]
    %v606 = vld [vmem:[#allocation13 + $0xc8] sm:$0xff]
    %v607 = vld [vmem:[#allocation13 + $0xd0] sm:$0xff]
    %v608 = vld [vmem:[#allocation13 + $0xd8] sm:$0xff]
    %v609 = vld [vmem:[#allocation13 + $0xe0] sm:$0xff]
    %v610 = vld [vmem:[#allocation13 + $0xe8] sm:$0xff]
    %v611 = vld [vmem:[#allocation13 + $0xf0] sm:$0xff]
    %v612 = vld [vmem:[#allocation13 + $0xf8] sm:$0xff]
    %v613 = vld [vmem:[#allocation13 + $0x100] sm:$0xff]
    %v614 = vld [vmem:[#allocation13 + $0x108] sm:$0xff]
    %v615 = vld [vmem:[#allocation13 + $0x110] sm:$0xff]
    %v616 = vld [vmem:[#allocation13 + $0x118] sm:$0xff]
    %v617 = vld [vmem:[#allocation13 + $0x120] sm:$0xff]
    %v618 = vld [vmem:[#allocation13 + $0x128] sm:$0xff]
    %v619 = vld [vmem:[#allocation13 + $0x130] sm:$0xff]
    %v620 = vld [vmem:[#allocation13 + $0x138] sm:$0xff]
    %v621 = vld [vmem:[#allocation13 + $0x140] sm:$0xff]
    %v622 = vld [vmem:[#allocation13 + $0x148] sm:$0xff]
    %v623 = vld [vmem:[#allocation13 + $0x150] sm:$0xff]
    %v624 = vld [vmem:[#allocation13 + $0x158] sm:$0xff]
    %v625 = vld [vmem:[#allocation13 + $0x160] sm:$0xff]
    %v626 = vld [vmem:[#allocation13 + $0x168] sm:$0xff]
    %v627 = vld [vmem:[#allocation13 + $0x170] sm:$0xff]
    %v628 = vld [vmem:[#allocation13 + $0x178] sm:$0xff]
    %629 = vmatprep.subr.mxu0 %v582
    %630 = vmatpush1.msra.mxu0 %v581
    %631 = vmatprep.subr.mxu0 %v585
    %632 = vmatpush1.msra.mxu0 %v584
    %633 = vmatprep.subr.mxu0 %v588
    %634 = vmatpush1.msra.mxu0 %v587
    %635 = vmatprep.subr.mxu0 %v591
    %636 = vmatpush1.msra.mxu0 %v590
    %637 = vmatprep.subr.mxu0 %v594
    %638 = vmatpush1.msra.mxu0 %v593
    %639 = vmatprep.subr.mxu0 %v597
    %640 = vmatpush1.msra.mxu0 %v596
    %641 = vmatprep.subr.mxu0 %v600
    %642 = vmatpush1.msra.mxu0 %v599
    %643 = vmatprep.subr.mxu0 %v603
    %644 = vmatpush1.msra.mxu0 %v602
    %645 = vmatprep.subr.mxu0 %v606
    %646 = vmatpush1.msra.mxu0 %v605
    %647 = vmatprep.subr.mxu0 %v609
    %648 = vmatpush1.msra.mxu0 %v608
    %649 = vmatprep.subr.mxu0 %v612
    %650 = vmatpush1.msra.mxu0 %v611
    %651 = vmatprep.subr.mxu0 %v615
    %652 = vmatpush1.msra.mxu0 %v614
    %653 = vmatprep.subr.mxu0 %v618
    %654 = vmatpush1.msra.mxu0 %v617
    %655 = vmatprep.subr.mxu0 %v621
    %656 = vmatpush1.msra.mxu0 %v620
    %657 = vmatprep.subr.mxu0 %v624
    %658 = vmatpush1.msra.mxu0 %v623
    %659 = vmatprep.subr.mxu0 %v627
    %660 = vmatpush1.msra.mxu0 %v626
    %661 = vmatprep.subr.mxu0 0.0
    %662 = vmatpush1.msra.mxu0 0.0
    %663 = vmatprep.subr.mxu0 0.0
    %664 = vmatpush1.msra.mxu0 0.0
    %665 = vmatprep.subr.mxu0 0.0
    %666 = vmatpush1.msra.mxu0 0.0
    %667 = vmatprep.subr.mxu0 0.0
    %668 = vmatpush1.msra.mxu0 0.0
    %669 = vmatprep.subr.mxu0 0.0
    %670 = vmatpush1.msra.mxu0 0.0
    %671 = vmatprep.subr.mxu0 0.0
    %672 = vmatpush1.msra.mxu0 0.0
    %673 = vmatprep.subr.mxu0 0.0
    %674 = vmatpush1.msra.mxu0 0.0
    %675 = vmatprep.subr.mxu0 0.0
    %676 = vmatpush1.msra.mxu0 0.0
    %677 = vmatprep.subr.mxu0 0.0
    %678 = vmatpush1.msra.mxu0 0.0
    %679 = vmatprep.subr.mxu0 0.0
    %680 = vmatpush1.msra.mxu0 0.0
    %681 = vmatprep.subr.mxu0 0.0
    %682 = vmatpush1.msra.mxu0 0.0
    %683 = vmatprep.subr.mxu0 0.0
    %684 = vmatpush1.msra.mxu0 0.0
    %685 = vmatprep.subr.mxu0 0.0
    %686 = vmatpush1.msra.mxu0 0.0
    %687 = vmatprep.subr.mxu0 0.0
    %688 = vmatpush1.msra.mxu0 0.0
    %689 = vmatprep.subr.mxu0 0.0
    %690 = vmatpush1.msra.mxu0 0.0
    %691 = vmatprep.subr.mxu0 0.0
    %692 = vmatpush1.msra.mxu0 0.0
    %693 = vmatprep.mubr.f32.mxu0 0.0
    %694 = vmatmul.mubr.f32.gmra.mrb[0].mxu0 %v577
    %v695 = vpop.f32.mrb[0].mxu0
    %v696 = vadd.f32 0.0, %v695
    %v697 = vpop.f32.mrb[0].mxu0
    %v698 = vadd.f32 0.0, %v697
    %699 = vmatprep.mubr.f32.mxu0 0.0
    %700 = vmatmul.mubr.f32.gmra.mrb[0].mxu0 %v578
    %v701 = vpop.f32.mrb[0].mxu0
    %v702 = vadd.f32 0.0, %v701
    %v703 = vpop.f32.mrb[0].mxu0
    %v704 = vadd.f32 0.0, %v703
    %705 = vmatprep.mubr.f32.mxu0 0.0
    %706 = vmatmul.mubr.f32.gmra.mrb[0].mxu0 %v579
    %v707 = vpop.f32.mrb[0].mxu0
    %v708 = vadd.f32 0.0, %v707
    %v709 = vpop.f32.mrb[0].mxu0
    %v710 = vadd.f32 0.0, %v709
    %711 = vmatprep.mubr.f32.mxu0 0.0
    %712 = vmatmul.mubr.f32.gmra.mrb[0].mxu0 %v580
    %v713 = vpop.f32.mrb[0].mxu0
    %v714 = vadd.f32 0.0, %v713
    %v715 = vpop.f32.mrb[0].mxu0
    %v716 = vadd.f32 0.0, %v715
    %717 = vdwg.mxu0
    %718 = vmatprep.subr.mxu0 0.0
    %719 = vmatpush1.msra.mxu0 %v583
    %720 = vmatprep.subr.mxu0 0.0
    %721 = vmatpush1.msra.mxu0 %v586
    %722 = vmatprep.subr.mxu0 0.0
    %723 = vmatpush1.msra.mxu0 %v589
    %724 = vmatprep.subr.mxu0 0.0
    %725 = vmatpush1.msra.mxu0 %v592
    %726 = vmatprep.subr.mxu0 0.0
    %727 = vmatpush1.msra.mxu0 %v595
    %728 = vmatprep.subr.mxu0 0.0
    %729 = vmatpush1.msra.mxu0 %v598
    %730 = vmatprep.subr.mxu0 0.0
    %731 = vmatpush1.msra.mxu0 %v601
    %732 = vmatprep.subr.mxu0 0.0
    %733 = vmatpush1.msra.mxu0 %v604
    %734 = vmatprep.subr.mxu0 0.0
    %735 = vmatpush1.msra.mxu0 %v607
    %736 = vmatprep.subr.mxu0 0.0
    %737 = vmatpush1.msra.mxu0 %v610
    %738 = vmatprep.subr.mxu0 0.0
    %739 = vmatpush1.msra.mxu0 %v613
    %740 = vmatprep.subr.mxu0 0.0
    %741 = vmatpush1.msra.mxu0 %v616
    %742 = vmatprep.subr.mxu0 0.0
    %743 = vmatpush1.msra.mxu0 %v619
    %744 = vmatprep.subr.mxu0 0.0
    %745 = vmatpush1.msra.mxu0 %v622
    %746 = vmatprep.subr.mxu0 0.0
    %747 = vmatpush1.msra.mxu0 %v625
    %748 = vmatprep.subr.mxu0 0.0
    %749 = vmatpush1.msra.mxu0 %v628
    %750 = vmatprep.subr.mxu0 0.0
    %751 = vmatpush1.msra.mxu0 0.0
    %752 = vmatprep.subr.mxu0 0.0
    %753 = vmatpush1.msra.mxu0 0.0
    %754 = vmatprep.subr.mxu0 0.0
    %755 = vmatpush1.msra.mxu0 0.0
    %756 = vmatprep.subr.mxu0 0.0
    %757 = vmatpush1.msra.mxu0 0.0
    %758 = vmatprep.subr.mxu0 0.0
    %759 = vmatpush1.msra.mxu0 0.0
    %760 = vmatprep.subr.mxu0 0.0
    %761 = vmatpush1.msra.mxu0 0.0
    %762 = vmatprep.subr.mxu0 0.0
    %763 = vmatpush1.msra.mxu0 0.0
    %764 = vmatprep.subr.mxu0 0.0
    %765 = vmatpush1.msra.mxu0 0.0
    %766 = vmatprep.subr.mxu0 0.0
    %767 = vmatpush1.msra.mxu0 0.0
    %768 = vmatprep.subr.mxu0 0.0
    %769 = vmatpush1.msra.mxu0 0.0
    %770 = vmatprep.subr.mxu0 0.0
    %771 = vmatpush1.msra.mxu0 0.0
    %772 = vmatprep.subr.mxu0 0.0
    %773 = vmatpush1.msra.mxu0 0.0
    %774 = vmatprep.subr.mxu0 0.0
    %775 = vmatpush1.msra.mxu0 0.0
    %776 = vmatprep.subr.mxu0 0.0
    %777 = vmatpush1.msra.mxu0 0.0
    %778 = vmatprep.subr.mxu0 0.0
    %779 = vmatpush1.msra.mxu0 0.0
    %780 = vmatprep.subr.mxu0 0.0
    %781 = vmatpush1.msra.mxu0 0.0
    %782 = vmatprep.mubr.f32.mxu0 0.0
    %783 = vmatmul.mubr.f32.gmra.mrb[0].mxu0 %v577
    %v784 = vpop.f32.mrb[0].mxu0
    %v785 = vadd.f32 0.0, %v784
    %v786 = vpop.f32.mrb[0].mxu0
    %787 = vmatprep.mubr.f32.mxu0 0.0
    %788 = vmatmul.mubr.f32.gmra.mrb[0].mxu0 %v578
    %v789 = vpop.f32.mrb[0].mxu0
    %v790 = vadd.f32 0.0, %v789
    %v791 = vpop.f32.mrb[0].mxu0
    %792 = vmatprep.mubr.f32.mxu0 0.0
    %793 = vmatmul.mubr.f32.gmra.mrb[0].mxu0 %v579
    %v794 = vpop.f32.mrb[0].mxu0
    %v795 = vadd.f32 0.0, %v794
    %v796 = vpop.f32.mrb[0].mxu0
    %797 = vmatprep.mubr.f32.mxu0 0.0
    %798 = vmatmul.mubr.f32.gmra.mrb[0].mxu0 %v580
    %v799 = vpop.f32.mrb[0].mxu0
    %v800 = vadd.f32 0.0, %v799
    %v801 = vpop.f32.mrb[0].mxu0
    %802 = vdwg.mxu0
    %v803 = vadd.f32 %v470, %v696
    %v804 = vadd.f32 %v472, %v698
    %v805 = vadd.f32 %v559, %v785
    %v806 = vadd.f32 %v476, %v702
    %v807 = vadd.f32 %v478, %v704
    %v808 = vadd.f32 %v564, %v790
    %v809 = vadd.f32 %v482, %v708
    %v810 = vadd.f32 %v484, %v710
    %v811 = vadd.f32 %v569, %v795
    %v812 = vadd.f32 %v488, %v714
    %v813 = vadd.f32 %v490, %v716
    %v814 = vadd.f32 %v574, %v800
    %v815 = vld [vmem:[%s7] sm:$0x7]
    %v817 = vlaneseq
    %v818 = vshrl.u32 %v817, 7
    %v819 = vsub.s32 0, %v818
    %v820 = vrot.slane %v815, %v819
    %v821 = vlaneseq
    %v822 = vshrl.u32 %v821, 7
    %v823 = vsub.s32 1, %v822
    %v824 = vrot.slane %v815, %v823
    %v825 = vlaneseq
    %v826 = vshrl.u32 %v825, 7
    %v827 = vsub.s32 2, %v826
    %v828 = vrot.slane %v815, %v827
    %v832 = vadd.f32 %v803, %v820
    %v833 = vadd.f32 %v804, %v824
    %v834 = vadd.f32 %v805, %v828
    %v835 = vadd.f32 %v806, %v820
    %v836 = vadd.f32 %v807, %v824
    %v837 = vadd.f32 %v808, %v828
    %v838 = vadd.f32 %v809, %v820
    %v839 = vadd.f32 %v810, %v824
    %v840 = vadd.f32 %v811, %v828
    %v841 = vadd.f32 %v812, %v820
    %v842 = vadd.f32 %v813, %v824
    %v843 = vadd.f32 %v814, %v828
    %v844 = vld [vmem:[#allocation8] sm:$0xff]
    %v845 = vld [vmem:[#allocation8 + $0x8] sm:$0xff]
    %v846 = vld [vmem:[#allocation8 + $0x10] sm:$0xff]
    %v847 = vld [vmem:[#allocation8 + $0x18] sm:$0xff]
    %v848 = vld [vmem:[#allocation8 + $0x20] sm:$0xff]
    %v849 = vld [vmem:[#allocation8 + $0x28] sm:$0xff]
    %v850 = vld [vmem:[#allocation8 + $0x30] sm:$0xff]
    %v851 = vld [vmem:[#allocation8 + $0x38] sm:$0xff]
    %v852 = vld [vmem:[#allocation8 + $0x40] sm:$0xff]
    %v853 = vld [vmem:[#allocation8 + $0x48] sm:$0xff]
    %v854 = vld [vmem:[#allocation8 + $0x50] sm:$0xff]
    %v855 = vld [vmem:[#allocation8 + $0x58] sm:$0xff]
    %v856 = vadd.f32 %v832, %v844
    %v857 = vadd.f32 %v833, %v845
    %v858 = vadd.f32 %v834, %v846
    %v859 = vadd.f32 %v835, %v847
    %v860 = vadd.f32 %v836, %v848
    %v861 = vadd.f32 %v837, %v849
    %v862 = vadd.f32 %v838, %v850
    %v863 = vadd.f32 %v839, %v851
    %v864 = vadd.f32 %v840, %v852
    %v865 = vadd.f32 %v841, %v853
    %v866 = vadd.f32 %v842, %v854
    %v867 = vadd.f32 %v843, %v855
    %868 = vst [vmem:[#allocation14] sm:$0xff] %v856
    %869 = vst [vmem:[#allocation14 + $0x8] sm:$0xff] %v857
    %870 = vst [vmem:[#allocation14 + $0x10] sm:$0xff] %v858
    %871 = vst [vmem:[#allocation14 + $0x18] sm:$0xff] %v859
    %872 = vst [vmem:[#allocation14 + $0x20] sm:$0xff] %v860
    %873 = vst [vmem:[#allocation14 + $0x28] sm:$0xff] %v861
    %874 = vst [vmem:[#allocation14 + $0x30] sm:$0xff] %v862
    %875 = vst [vmem:[#allocation14 + $0x38] sm:$0xff] %v863
    %876 = vst [vmem:[#allocation14 + $0x40] sm:$0xff] %v864
    %877 = vst [vmem:[#allocation14 + $0x48] sm:$0xff] %v865
    %878 = vst [vmem:[#allocation14 + $0x50] sm:$0xff] %v866
    %879 = vst [vmem:[#allocation14 + $0x58] sm:$0xff] %v867
    // Predicated region
    $region62: #{tpu_custom_call.1} parent=1 // pred_check
      _
    $region63: #{tpu_custom_call.1} parent=1 // pred_check_branch
      %881 = sbr.rel (0) target = $region65
    $region64: #{tpu_custom_call.1} parent=1 // pred_region
      %s883 = ssub.s32 1536, 1536
      %884 = vsyncadd [#allocation4], %s883
      %s885 = sshll.u32 [#allocation14], 4
      %s886 = int_to_ptr.vmem [resolvable:$true] %s885
      %891 = dma.vmem_to_hbm [thread:$0]  %s886, 1536, %s8, [#allocation4], 384, 384, 24
    $region65: #{tpu_custom_call.1} parent=1 // pred_fallthru
      _
    // Predicated region
    $region66: #{tpu_custom_call.1} parent=1 // pred_check
      _
    $region67: #{tpu_custom_call.1} parent=1 // pred_check_branch
      %893 = sbr.rel (0) target = $region69
    $region68: #{tpu_custom_call.1} parent=1 // pred_region
      %894 = dma.done [#allocation4], 1536
    $region69: #{tpu_custom_call.1} parent=1 // pred_fallthru
      _
    %895 = vsyncpa [#allocation3], 1
    %896 = vsyncpa [#allocation6], 1
    %897 = vsyncpa [#allocation9], 1
    %898 = vsyncpa [#allocation12], 1
    %899 = vsyncpa [#allocation4], 1

</llo_original>
